<compile_context>
chip_gen: v7x
topology: tpu7x:2x2x1
jax: 0.10.0
libtpu: 0.0.40
codegen_flags: <defaults>
</compile_context>

<pallas_src>
import functools
import math

import jax
import jax.numpy as jnp
from jax.experimental import pallas as pl
from jax.experimental.pallas import tpu as pltpu

F32 = jnp.float32
BF16 = jnp.bfloat16


def _round_up(x, m):
    return (x + m - 1) // m * m


def _pick_div(size, desired, granule):
    """Largest multiple of `granule` <= desired that divides `size` (size % granule == 0)."""
    t = min(desired, size)
    t -= t % granule
    while t > granule and size % t:
        t -= granule
    return t


def _gelu_new(x):
    # GPT-2 "gelu_new" (tanh approximation), f32 vector math.
    return 0.5 * x * (1.0 + jnp.tanh(
        jnp.sqrt(2.0 / jnp.pi).astype(x.dtype) * (x + 0.044715 * x * x * x)))


# ---------------------------------------------------------------------------
# Prepared (pre-padded, pre-cast) linear layers — done ONCE at init.
# ---------------------------------------------------------------------------
def prepare_linear(w, b=None):
    K, N = w.shape
    Kp, Np = _round_up(K, 128), _round_up(N, 128)
    if b is None:
        b = jnp.zeros((N,), F32)
    return {
        'w': jnp.pad(w.astype(F32), ((0, Kp - K), (0, Np - N))).astype(BF16),
        'b': jnp.pad(b.astype(F32), (0, Np - N)).reshape(1, Np),
        'K': K, 'N': N, 'Kp': Kp, 'Np': Np,
    }


# ---------------------------------------------------------------------------
# Tiled matmul + bias (+ optional fused activation / fused residual add).
# bf16 MXU operands, f32 accumulator, f32 epilogue.
# ---------------------------------------------------------------------------
def _mm_epilogue(acc, bias, res, activation):
    out = acc + bias
    if activation == "relu":
        out = jnp.maximum(out, 0.0)
    elif activation == "gelu":
        out = _gelu_new(out)
    if res is not None:
        out = out + res
    return out


def _matmul_kernel(a_ref, b_ref, bias_ref, o_ref, acc_ref, *, activation):
    @pl.when(pl.program_id(2) == 0)
    def _():
        acc_ref[...] = jnp.zeros_like(acc_ref)

    acc_ref[...] += jnp.dot(a_ref[...], b_ref[...],
                            preferred_element_type=jnp.float32)

    @pl.when(pl.program_id(2) == pl.num_programs(2) - 1)
    def _():
        o_ref[...] = _mm_epilogue(acc_ref[...], bias_ref[...], None,
                                  activation).astype(o_ref.dtype)


def _matmul_res_kernel(a_ref, b_ref, bias_ref, res_ref, o_ref, acc_ref, *, activation):
    @pl.when(pl.program_id(2) == 0)
    def _():
        acc_ref[...] = jnp.zeros_like(acc_ref)

    acc_ref[...] += jnp.dot(a_ref[...], b_ref[...],
                            preferred_element_type=jnp.float32)

    @pl.when(pl.program_id(2) == pl.num_programs(2) - 1)
    def _():
        o_ref[...] = _mm_epilogue(acc_ref[...], bias_ref[...], res_ref[...],
                                  activation).astype(o_ref.dtype)


def pallas_matmul_p(a, lin, activation=None, residual=None,
                    tm=256, tn=256, tk=512):
    """a: [M, K] (any float dtype); lin: prepared linear.  Returns f32 [M, N]."""
    M, K = a.shape
    assert K == lin['K'], (K, lin['K'])
    Kp, Np = lin['Kp'], lin['Np']
    tk = _pick_div(Kp, tk, 128)
    tn = _pick_div(Np, tn, 128)
    tm = min(tm, _round_up(M, 8))
    Mp = _round_up(M, tm)

    a_p = jnp.pad(a.astype(F32), ((0, Mp - M), (0, Kp - K))).astype(BF16)

    inputs = [a_p, lin['w'], lin['b']]
    in_specs = [
        pl.BlockSpec((tm, tk), lambda i, j, k: (i, k)),
        pl.BlockSpec((tk, tn), lambda i, j, k: (k, j)),
        pl.BlockSpec((1, tn), lambda i, j, k: (0, j)),
    ]
    if residual is not None:
        assert residual.shape == (M, lin['N'])
        res_p = jnp.pad(residual.astype(F32),
                        ((0, Mp - M), (0, Np - lin['N'])))
        inputs.append(res_p)
        in_specs.append(pl.BlockSpec((tm, tn), lambda i, j, k: (i, j)))
        kernel = functools.partial(_matmul_res_kernel, activation=activation)
    else:
        kernel = functools.partial(_matmul_kernel, activation=activation)

    grid = (Mp // tm, Np // tn, Kp // tk)
    out = pl.pallas_call(
        kernel,
        out_shape=jax.ShapeDtypeStruct((Mp, Np), F32),
        grid=grid,
        in_specs=in_specs,
        out_specs=pl.BlockSpec((tm, tn), lambda i, j, k: (i, j)),
        scratch_shapes=[pltpu.VMEM((tm, tn), jnp.float32)],
        compiler_params=pltpu.CompilerParams(
            dimension_semantics=("parallel", "parallel", "arbitrary")),
    )(*inputs)
    return out[:M, :lin['N']]


# ---------------------------------------------------------------------------
# Spatial mean pool (mean over HW, i.e. mean([2,3]) in NCHW) — HW-tiled accumulate.
# ---------------------------------------------------------------------------
def _pool_kernel(feat_ref, o_ref, acc_ref, *, inv_hw):
    @pl.when(pl.program_id(0) == 0)
    def _():
        acc_ref[...] = jnp.zeros_like(acc_ref)

    acc_ref[...] += jnp.sum(feat_ref[...], axis=1)

    @pl.when(pl.program_id(0) == pl.num_programs(0) - 1)
    def _():
        o_ref[...] = (acc_ref[...] * inv_hw).astype(o_ref.dtype)


def pallas_spatial_mean(feat, thw=256):
    B, HW, C = feat.shape
    thw = min(thw, _round_up(HW, 8))
    HWp = _round_up(HW, thw)
    feat_p = jnp.pad(feat.astype(F32), ((0, 0), (0, HWp - HW), (0, 0)))
    return pl.pallas_call(
        functools.partial(_pool_kernel, inv_hw=1.0 / HW),
        out_shape=jax.ShapeDtypeStruct((B, C), F32),
        grid=(HWp // thw,),
        in_specs=[pl.BlockSpec((B, thw, C), lambda j: (0, j, 0))],
        out_specs=pl.BlockSpec((B, C), lambda j: (0, 0)),
        scratch_shapes=[pltpu.VMEM((B, C), jnp.float32)],
        compiler_params=pltpu.CompilerParams(
            dimension_semantics=("arbitrary",)),
    )(feat_p)


# ---------------------------------------------------------------------------
# Combined embedding: wte(input_ids) + img_features.unsqueeze(1) + wpe
# ---------------------------------------------------------------------------
def _embed_add_kernel(tok_ref, img_ref, pos_ref, o_ref):
    o_ref[...] = tok_ref[...] + img_ref[...] + pos_ref[...]


def pallas_embed_add(tok, img, pos):
    B, S, D = tok.shape
    return pl.pallas_call(
        _embed_add_kernel,
        out_shape=jax.ShapeDtypeStruct((B, S, D), F32),
        grid=(B,),
        in_specs=[pl.BlockSpec((1, S, D), lambda b: (b, 0, 0)),
                  pl.BlockSpec((1, 1, D), lambda b: (b, 0, 0)),
                  pl.BlockSpec((1, S, D), lambda b: (0, 0, 0))],
        out_specs=pl.BlockSpec((1, S, D), lambda b: (b, 0, 0)),
        compiler_params=pltpu.CompilerParams(
            dimension_semantics=("parallel",)),
    )(tok.astype(F32), img.astype(F32), pos.astype(F32))


# ---------------------------------------------------------------------------
# LayerNorm over the last dim — row-tiled grid.
# ---------------------------------------------------------------------------
def _layernorm_kernel(x_ref, g_ref, b_ref, o_ref, *, eps):
    x = x_ref[...].astype(jnp.float32)
    mu = jnp.mean(x, axis=-1, keepdims=True)
    var = jnp.mean(jnp.square(x - mu), axis=-1, keepdims=True)
    y = (x - mu) * jax.lax.rsqrt(var + eps)
    o_ref[...] = (y * g_ref[...] + b_ref[...]).astype(o_ref.dtype)


def pallas_layernorm(x, g, b, eps=1e-5, tr=256):
    N, D = x.shape
    tr = min(tr, _round_up(N, 8))
    Nr = _round_up(N, tr)
    x_p = jnp.pad(x.astype(F32), ((0, Nr - N), (0, 0)))
    out = pl.pallas_call(
        functools.partial(_layernorm_kernel, eps=eps),
        out_shape=jax.ShapeDtypeStruct((Nr, D), F32),
        grid=(Nr // tr,),
        in_specs=[pl.BlockSpec((tr, D), lambda i: (i, 0)),
                  pl.BlockSpec((1, D), lambda i: (0, 0)),
                  pl.BlockSpec((1, D), lambda i: (0, 0))],
        out_specs=pl.BlockSpec((tr, D), lambda i: (i, 0)),
        compiler_params=pltpu.CompilerParams(
            dimension_semantics=("parallel",)),
    )(x_p, g.reshape(1, D).astype(F32), b.reshape(1, D).astype(F32))
    return out[:N]


# ---------------------------------------------------------------------------
# Causal self-attention (with HF-style additive padding mask), grid over heads.
# ---------------------------------------------------------------------------
def _attention_kernel(q_ref, k_ref, v_ref, mask_ref, o_ref, *, scale):
    q = q_ref[0].astype(jnp.float32)                     # [S, Dh]
    k = k_ref[0].astype(jnp.float32)
    v = v_ref[0].astype(jnp.float32)
    # q @ k^T without materializing a transpose.
    s = jax.lax.dot_general(q, k, (((1,), (1,)), ((), ())),
                            preferred_element_type=jnp.float32) * scale
    S = q.shape[0]
    row = jax.lax.broadcasted_iota(jnp.int32, (S, S), 0)
    col = jax.lax.broadcasted_iota(jnp.int32, (S, S), 1)
    s = jnp.where(col <= row, s, jnp.float32(-1e9))      # causal mask
    s = s + (mask_ref[0] - 1.0) * 1e9                    # padding mask [1, S]
    m = jnp.max(s, axis=-1, keepdims=True)
    p = jnp.exp(s - m)
    denom = jnp.sum(p, axis=-1, keepdims=True)
    p = p * pl.reciprocal(denom, approx=True)            # EUP slot, frees VALU
    o_ref[0] = jnp.dot(p, v,
                       preferred_element_type=jnp.float32).astype(o_ref.dtype)


def pallas_attention(q, k, v, mask, scale):
    # q/k/v: [BH, S, Dh]; mask: [BH, 1, S]
    BH, S, Dh = q.shape
    qkv_spec = pl.BlockSpec((1, S, Dh), lambda h: (h, 0, 0))
    return pl.pallas_call(
        functools.partial(_attention_kernel, scale=scale),
        out_shape=jax.ShapeDtypeStruct((BH, S, Dh), F32),
        grid=(BH,),
        in_specs=[qkv_spec, qkv_spec, qkv_spec,
                  pl.BlockSpec((1, 1, S), lambda h: (h, 0, 0))],
        out_specs=pl.BlockSpec((1, S, Dh), lambda h: (h, 0, 0)),
        compiler_params=pltpu.CompilerParams(
            dimension_semantics=("parallel",)),
    )(q.astype(F32), k.astype(F32), v.astype(F32), mask.astype(F32))


# ---------------------------------------------------------------------------
# Per-token cross-entropy — row-tiled grid.
# ---------------------------------------------------------------------------
def _xent_kernel(logits_ref, labels_ref, loss_ref):
    logits = logits_ref[...].astype(jnp.float32)         # [tr, V]
    labels = labels_ref[...]                             # [tr, 1] int32
    m = jnp.max(logits, axis=-1, keepdims=True)
    lse = jnp.log(jnp.sum(jnp.exp(logits - m), axis=-1, keepdims=True)) + m
    col = jax.lax.broadcasted_iota(jnp.int32, logits.shape, 1)
    picked = jnp.sum(jnp.where(col == labels, logits, 0.0),
                     axis=-1, keepdims=True)
    loss_ref[...] = lse - picked


def pallas_xent(logits, labels):
    N, V = logits.shape
    max_rows = max(8, ((4 << 20) // (V * 4)) // 8 * 8)   # cap block ~4 MiB
    tr = min(max_rows, 128, _round_up(N, 8))
    Nr = _round_up(N, tr)
    logits_p = jnp.pad(logits.astype(F32), ((0, Nr - N), (0, 0)))
    labels_p = jnp.pad(labels.astype(jnp.int32), ((0, Nr - N), (0, 0)))
    out = pl.pallas_call(
        _xent_kernel,
        out_shape=jax.ShapeDtypeStruct((Nr, 1), F32),
        grid=(Nr // tr,),
        in_specs=[pl.BlockSpec((tr, V), lambda i: (i, 0)),
                  pl.BlockSpec((tr, 1), lambda i: (i, 0))],
        out_specs=pl.BlockSpec((tr, 1), lambda i: (i, 0)),
        compiler_params=pltpu.CompilerParams(
            dimension_semantics=("parallel",)),
    )(logits_p, labels_p)
    return out[:N]


# ---------------------------------------------------------------------------
# Parameters (deterministic synthetic init — no checkpoint loading).
# Weights are padded / cast bf16 / (LM head) transposed ONCE here.
# ---------------------------------------------------------------------------
def _dense(key, shape):
    return jax.random.normal(key, shape, F32) * 0.02


def init_params(key, *, in_ch, feat_dim, hidden, n_head, n_layer, vocab, max_pos):
    del n_head  # not needed for parameter shapes

    def nxt():
        nonlocal key
        key, sub = jax.random.split(key)
        return sub

    wte = _dense(nxt(), (vocab, hidden))
    params = {
        'resnet': prepare_linear(_dense(nxt(), (3 * 3 * in_ch, feat_dim))),  # im2col layout
        'proj': prepare_linear(_dense(nxt(), (feat_dim, hidden))),           # nn.Linear(2048, hidden)
        'wte': wte,
        'wpe': _dense(nxt(), (max_pos, hidden)),
        'lm_head': prepare_linear(wte.T),        # tied LM head, pre-transposed once
        'lnf_g': jnp.ones((hidden,), F32),
        'lnf_b': jnp.zeros((hidden,), F32),
        'layers': [],
    }
    for _ in range(n_layer):
        params['layers'].append({
            'ln1_g': jnp.ones((hidden,), F32),
            'ln1_b': jnp.zeros((hidden,), F32),
            'qkv': prepare_linear(_dense(nxt(), (hidden, 3 * hidden))),
            'attn_out': prepare_linear(_dense(nxt(), (hidden, hidden))),
            'ln2_g': jnp.ones((hidden,), F32),
            'ln2_b': jnp.zeros((hidden,), F32),
            'fc': prepare_linear(_dense(nxt(), (hidden, 4 * hidden))),
            'mproj': prepare_linear(_dense(nxt(), (4 * hidden, hidden))),
        })
    return params


# ---------------------------------------------------------------------------
# Full forward pass (mirrors ImageCaptioningModel.forward; returns (loss, logits)).
# ---------------------------------------------------------------------------
def image_captioning_forward(params, cfg, images, input_ids, attention_mask=None):
    B, C_in, H, W = images.shape
    n_head = cfg['n_head']

    # --- resnet stem: 3x3 / stride 2 / pad 1 conv + ReLU (im2col glue + Pallas matmul)
    x = jnp.transpose(images, (0, 2, 3, 1)).astype(F32)      # NCHW -> NHWC
    xp = jnp.pad(x, ((0, 0), (1, 1), (1, 1), (0, 0)))
    Ho, Wo = H // 2, W // 2
    # TODO(synk): folding the 9 conv taps into the matmul K grid axis needs strided DMA
    # that BlockSpec index_maps cannot express; im2col concat stays as JAX glue.
    patches = [xp[:, kh:kh + 2 * Ho:2, kw:kw + 2 * Wo:2, :]
               for kh in range(3) for kw in range(3)]
    patches2d = jnp.concatenate(patches, axis=-1).reshape(B * Ho * Wo, 9 * C_in)
    feat2d = pallas_matmul_p(patches2d, params['resnet'], activation='relu')
    feat = feat2d.reshape(B, Ho * Wo, -1)                    # [B, HW, 2048]

    # --- img_features = resnet(images).mean([2,3]); proj(img_features)
    pooled = pallas_spatial_mean(feat)                       # [B, 2048]
    img_features = pallas_matmul_p(pooled, params['proj'])   # [B, D]

    # --- GPT-2
    S = input_ids.shape[1]
    D = params['wte'].shape[1]
    Dh = D // n_head
    if attention_mask is None:
        attention_mask = jnp.ones((B, S), F32)
    attention_mask = attention_mask.astype(F32)

    # TODO(synk): embedding row-gather (wte(input_ids)) stays in plain JAX.
    tok_emb = jnp.take(params['wte'], input_ids, axis=0)     # [B, S, D]
    pos_emb = params['wpe'][:S][None]                        # [1, S, D]
    h2d = pallas_embed_add(tok_emb, img_features[:, None, :],
                           pos_emb).reshape(B * S, D)        # [B*S, D]

    def to_heads(t):
        return (t.reshape(B, S, n_head, Dh)
                 .transpose(0, 2, 1, 3)
                 .reshape(B * n_head, S, Dh))

    mask_bh = jnp.repeat(attention_mask, n_head, axis=0).reshape(B * n_head, 1, S)

    for layer in params['layers']:
        hn = pallas_layernorm(h2d, layer['ln1_g'], layer['ln1_b'])
        qkv = pallas_matmul_p(hn, layer['qkv'])              # [BS, 3D]
        q, k, v = jnp.split(qkv, 3, axis=-1)

        # TODO(synk): head split/merge transposes stay in JAX (Dh < 128 lanes).
        attn = pallas_attention(to_heads(q), to_heads(k), to_heads(v),
                                mask_bh, scale=1.0 / math.sqrt(Dh))
        attn = (attn.reshape(B, n_head, S, Dh)
                    .transpose(0, 2, 1, 3)
                    .reshape(B * S, D))
        # attention output projection with the residual add fused into the epilogue
        h2d = pallas_matmul_p(attn, layer['attn_out'], residual=h2d)

        hn2 = pallas_layernorm(h2d, layer['ln2_g'], layer['ln2_b'])
        mlp_h = pallas_matmul_p(hn2, layer['fc'], activation='gelu')
        # MLP output projection with the residual add fused into the epilogue
        h2d = pallas_matmul_p(mlp_h, layer['mproj'], residual=h2d)

    hf = pallas_layernorm(h2d, params['lnf_g'], params['lnf_b'])
    logits2d = pallas_matmul_p(hf, params['lm_head'])        # tied LM head, no bias
    logits = logits2d.reshape(B, S, -1)                      # [B, S, V]

    # --- HF causal-LM loss with labels = input_ids (shift by one)
    V = logits.shape[-1]
    shift_logits = logits[:, :-1, :].reshape(B * (S - 1), V)
    shift_labels = input_ids[:, 1:].reshape(B * (S - 1), 1).astype(jnp.int32)
    per_token = pallas_xent(shift_logits, shift_labels)      # [N, 1]
    loss = jnp.mean(per_token)
    return loss, logits


if __name__ == "__main__":
    cfg = dict(in_ch=4, feat_dim=2048, hidden=32, n_head=2, n_layer=2,
               vocab=64, max_pos=32)
    key = jax.random.PRNGKey(0)
    k_params, k_img, k_ids = jax.random.split(key, 3)
    params = init_params(k_params, **cfg)

    B, S = 2, 8
    images = jax.random.normal(k_img, (B, cfg['in_ch'], 16, 16), F32)    # NCHW
    input_ids = jax.random.randint(k_ids, (B, S), 0, cfg['vocab'], dtype=jnp.int32)
    attention_mask = jnp.ones((B, S), F32)

    loss, logits = image_captioning_forward(params, cfg, images, input_ids,
                                            attention_mask)
    jax.block_until_ready((loss, logits))
    assert logits.shape == (B, S, cfg['vocab'])
    assert loss.shape == ()
    print("KERNEL_OK")
</pallas_src>

<mosaic_0001>
module attributes {stable_mosaic.version = 11 : i64} {
  func.func @_matmul_kernel(%arg0: i32, %arg1: i32, %arg2: i32, %arg3: memref<128x128xbf16, #tpu.memory_space<vmem>>, %arg4: memref<128x256xbf16, #tpu.memory_space<vmem>>, %arg5: memref<1x256xf32, #tpu.memory_space<vmem>>, %arg6: memref<128x256xf32, #tpu.memory_space<vmem>>, %arg7: memref<128x256xf32, #tpu.memory_space<vmem>>) attributes {dimension_semantics = [#tpu.dimension_semantics<parallel>, #tpu.dimension_semantics<parallel>, #tpu.dimension_semantics<arbitrary>], iteration_bounds = array<i64: 1, 8, 1>, scalar_prefetch = 0 : i64, scratch_operands = 1 : i64, tpu.core_type = #tpu.core_type<tc>, window_params = [{transform_indices = @transform_0, window_bounds = array<i64: 128, 128>}, {transform_indices = @transform_1, window_bounds = array<i64: 128, 256>}, {transform_indices = @transform_2, window_bounds = array<i64: 1, 256>}, {transform_indices = @transform_3, window_bounds = array<i64: 128, 256>}]} {
    %c0_i32 = arith.constant 0 : i32
    %0 = arith.cmpi eq, %arg2, %c0_i32 : i32
    %1 = arith.extui %0 : i1 to i32
    %c0_i32_0 = arith.constant 0 : i32
    %2 = arith.cmpi ne, %1, %c0_i32_0 : i32
    scf.if %2 {
      %cst_10 = arith.constant 0.000000e+00 : f32
      %12 = vector.broadcast %cst_10 : f32 to vector<128x256xf32>
      %c0_11 = arith.constant 0 : index
      %c0_12 = arith.constant 0 : index
      %13 = vector.load %arg7[%c0_11, %c0_12] : memref<128x256xf32, #tpu.memory_space<vmem>>, vector<128x256xf32>
      tpu.vector_store %arg7[%c0_11, %c0_12], %12 {strides = array<i32>} : memref<128x256xf32, #tpu.memory_space<vmem>>, vector<128x256xf32>,
    } else {
    }
    %c0 = arith.constant 0 : index
    %c0_1 = arith.constant 0 : index
    %3 = vector.load %arg7[%c0, %c0_1] : memref<128x256xf32, #tpu.memory_space<vmem>>, vector<128x256xf32>
    %c0_2 = arith.constant 0 : index
    %c0_3 = arith.constant 0 : index
    %4 = vector.load %arg3[%c0_2, %c0_3] : memref<128x128xbf16, #tpu.memory_space<vmem>>, vector<128x128xbf16>
    %c0_4 = arith.constant 0 : index
    %c0_5 = arith.constant 0 : index
    %5 = vector.load %arg4[%c0_4, %c0_5] : memref<128x256xbf16, #tpu.memory_space<vmem>>, vector<128x256xbf16>
    %cst = arith.constant dense<0.000000e+00> : vector<128x256xf32>
    %6 = tpu.matmul %4, %5, %cst {dimension_numbers = #tpu.dot_dimension_numbers<[1], [0], [0], [1], [0, 0, 1, 1], [], []>} : vector<128x128xbf16>, vector<128x256xbf16>, vector<128x256xf32> -> vector<128x256xf32>
    %7 = arith.addf %3, %6 : vector<128x256xf32>
    %c0_6 = arith.constant 0 : index
    %c0_7 = arith.constant 0 : index
    %8 = vector.load %arg7[%c0_6, %c0_7] : memref<128x256xf32, #tpu.memory_space<vmem>>, vector<128x256xf32>
    tpu.vector_store %arg7[%c0_6, %c0_7], %7 {strides = array<i32>} : memref<128x256xf32, #tpu.memory_space<vmem>>, vector<128x256xf32>,
    %c0_i32_8 = arith.constant 0 : i32
    %9 = arith.cmpi eq, %arg2, %c0_i32_8 : i32
    %10 = arith.extui %9 : i1 to i32
    %c0_i32_9 = arith.constant 0 : i32
    %11 = arith.cmpi ne, %10, %c0_i32_9 : i32
    scf.if %11 {
      %c0_10 = arith.constant 0 : index
      %c0_11 = arith.constant 0 : index
      %12 = vector.load %arg7[%c0_10, %c0_11] : memref<128x256xf32, #tpu.memory_space<vmem>>, vector<128x256xf32>
      %c0_12 = arith.constant 0 : index
      %c0_13 = arith.constant 0 : index
      %13 = vector.load %arg5[%c0_12, %c0_13] : memref<1x256xf32, #tpu.memory_space<vmem>>, vector<1x256xf32>
      %14 = vector.broadcast %13 : vector<1x256xf32> to vector<128x256xf32>
      %15 = arith.addf %12, %14 : vector<128x256xf32>
      %cst_14 = arith.constant 0.000000e+00 : f32
      %16 = vector.broadcast %cst_14 : f32 to vector<128x256xf32>
      %17 = arith.maximumf %15, %16 : vector<128x256xf32>
      %c0_15 = arith.constant 0 : index
      %c0_16 = arith.constant 0 : index
      %18 = vector.load %arg6[%c0_15, %c0_16] : memref<128x256xf32, #tpu.memory_space<vmem>>, vector<128x256xf32>
      tpu.vector_store %arg6[%c0_15, %c0_16], %17 {strides = array<i32>} : memref<128x256xf32, #tpu.memory_space<vmem>>, vector<128x256xf32>,
    } else {
    }
    return
  }
  func.func @transform_0(%arg0: i32, %arg1: i32, %arg2: i32) -> (i32, i32) {
    %c0_i32 = arith.constant 0 : i32
    return %arg0, %arg2 : i32, i32
  }
  func.func @transform_1(%arg0: i32, %arg1: i32, %arg2: i32) -> (i32, i32) {
    %c0_i32 = arith.constant 0 : i32
    return %arg2, %arg1 : i32, i32
  }
  func.func @transform_2(%arg0: i32, %arg1: i32, %arg2: i32) -> (i32, i32) {
    %c0_i32 = arith.constant 0 : i32
    %c0_i32_0 = arith.constant 0 : i32
    return %c0_i32, %arg1 : i32, i32
  }
  func.func @transform_3(%arg0: i32, %arg1: i32, %arg2: i32) -> (i32, i32) {
    %c0_i32 = arith.constant 0 : i32
    return %arg0, %arg1 : i32, i32
  }
}

</mosaic_0001>

<llo_original>
// kernel: tpu_custom_call.1
$region0: #{tpu_custom_call.1}
  #allocation0 [shape = 'u32[]', space=smem, size = 0x4, offset = 0x4, fixed_abs, tag = 'smem constant byte address 0x4 - core index']
  #allocation1 [shape = 'u32[144,128]{1,0:T(1,128)}', space=vmem, size = 0x12000, scoped, tag = 'internal scratch']
  #allocation2 [shape = 'f32[128,256]{1,0:T(8,128)}', space=vmem, size = 0x20000, scoped, tag = 'scratch operand']
  %s0 = inlined_call_operand.hbm [shape: bf16[128,128], index: 0, kind: input, shape index: {}]
  %s1 = inlined_call_operand.hbm [shape: bf16[128,2048], index: 1, kind: input, shape index: {}]
  %s2 = inlined_call_operand.hbm [shape: f32[1,2048], index: 2, kind: input, shape index: {}]
  %s3 = inlined_call_operand.hbm [shape: f32[128,2048], index: 3, kind: output, shape index: {}]
  %s4 = sld [smem:[#allocation0]]
  $region65: #{tpu_custom_call.1} parent=0
    _
  %s6 = ssub.s32 1, %s4
  %s7 = scalar_select 0, %s6, %s4
  $region1: #{tpu_custom_call.1} parent=0
    #allocation3 [shape = 'u8[32768]{0}', space=vmem, size = 0x8000, scoped, tag = 'input window, operand 0, single buffered']
    #allocation4 [shape = 's32[2]{0}', space=sflag, size = 0x8, scoped, tag = 'scoped memory for tpu_custom_call.1']
    #allocation5 [shape = 's32[2]{0}', space=sflag, size = 0x8, scoped, tag = 'scoped memory for tpu_custom_call.1']
    #allocation6 [shape = 'u8[131072]{0}', space=vmem, size = 0x20000, scoped, tag = 'input window, operand 1']
    #allocation7 [shape = 's32[2]{0}', space=sflag, size = 0x8, scoped, tag = 'scoped memory for tpu_custom_call.1']
    #allocation8 [shape = 'u8[2048]{0}', space=vmem, size = 0x800, scoped, tag = 'input window, operand 2']
    #allocation9 [shape = 'u8[262144]{0}', space=vmem, size = 0x40000, scoped, tag = 'output window, operand 0']
    %8 = vsyncpa [#allocation4], 0
    %9 = vsyncpa [#allocation7], 0
    %s10 = scalar_lea.sflag [#allocation7], 1
    %11 = vsyncpa %s10, 0
    %12 = vsyncpa [#allocation5], 0
    %s13 = scalar_lea.sflag [#allocation5], 1
    %14 = vsyncpa %s13, 0
    loop: start=0, step=1, limit=10
    $region2: #{tpu_custom_call.1} parent=1 // loop_pre_header
      _
    $region3: #{tpu_custom_call.1} parent=1 // loop_header
      %s16 = sphi 0, %s20
      %p17 = scmp.ge.s32.totalorder %s16, 10
      %s23 = sphi 0, %s42
      %s24 = sphi 0, %s38
      %s25 = sphi 0, %s34
      %s26 = sphi 0, %s23
      %s27 = sphi 0, %s24
      %s28 = sphi 0, %s25
      %s29 = sphi 0, %s26
      %s30 = sphi 0, %s27
      %s31 = sphi 0, %s28
      %s47 = sphi 0, %s49
      %s50 = sphi 0, %s47
      %s51 = sphi 0, %s50
      %s67 = sphi 0, %s51
      %s75 = sphi 0, %s77
      %s78 = sphi 0, %s75
      %s79 = sphi 0, %s78
      %s95 = sphi 0, %s79
      %s101 = sphi 0, %s103
      %s104 = sphi 0, %s101
      %s105 = sphi 0, %s104
      %s121 = sphi 0, %s105
      %s129 = sphi 0, %s131
      %s132 = sphi 0, %s129
      %s133 = sphi 0, %s132
      %s149 = sphi 0, %s133
    $region4: #{tpu_custom_call.1} parent=1 // loop_header_branch
      %19 = sbr.rel (%p17) target = $region8
    $region5: #{tpu_custom_call.1} parent=1 // loop_body
      %s21 = ssub.s32 %s16, 1
      %s22 = ssub.s32 %s16, 2
      %s32 = sadd.s32 1, %s25
      %p33 = scmp.ge.s32.totalorder %s32, 1
      %s34 = scalar_select %p33, 0, %s32
      %s35 = sadd.s32 1, %s24
      %s36 = scalar_select %p33, %s35, %s24
      %p37 = scmp.ge.s32.totalorder %s36, 8
      %s38 = scalar_select %p37, 0, %s36
      %s39 = sadd.s32 1, %s23
      %s40 = scalar_select %p37, %s39, %s23
      %p41 = scmp.ge.s32.totalorder %s40, 1
      %s42 = scalar_select %p41, 0, %s40
      %s43 = ssub.s32 %s23, %s42
      %s44 = ssub.s32 %s25, %s34
      %s45 = sor.u32 %s43, %s44
      %p46 = scmp.eq.s32.totalorder %s45, 0
      %s48 = sadd.s32 %s47, 1
      %s49 = scalar_select %p46, %s47, %s48
      %p52 = pneg %p46
      %p53 = scmp.eq.s32.totalorder %s16, 7
      %p54 = por %p52, %p53
      %p55 = scmp.ne.s32.totalorder %s47, %s50
      %p56 = scmp.eq.s32.totalorder %s16, 0
      %p57 = por %p55, %p56
      %p58 = scmp.ne.s32.totalorder %s47, %s50
      %p59 = scmp.eq.s32.totalorder %s21, 7
      %p60 = por %p58, %p59
      %p61 = scmp.ne.s32.totalorder %s50, %s51
      %p62 = scmp.eq.s32.totalorder %s21, 0
      %p63 = por %p61, %p62
      %p64 = scmp.ne.s32.totalorder %s50, %s51
      %p65 = scmp.eq.s32.totalorder %s22, 7
      %p66 = por %p64, %p65
      %p68 = scmp.ne.s32.totalorder %s51, %s67
      %p69 = scmp.eq.s32.totalorder %s22, 0
      %p70 = por %p68, %p69
      %s71 = ssub.s32 %s25, %s34
      %s72 = ssub.s32 %s24, %s38
      %s73 = sor.u32 %s71, %s72
      %p74 = scmp.eq.s32.totalorder %s73, 0
      %s76 = sadd.s32 %s75, 1
      %s77 = scalar_select %p74, %s75, %s76
      %p80 = pneg %p74
      %p81 = scmp.eq.s32.totalorder %s16, 7
      %p82 = por %p80, %p81
      %p83 = scmp.ne.s32.totalorder %s75, %s78
      %p84 = scmp.eq.s32.totalorder %s16, 0
      %p85 = por %p83, %p84
      %p86 = scmp.ne.s32.totalorder %s75, %s78
      %p87 = scmp.eq.s32.totalorder %s21, 7
      %p88 = por %p86, %p87
      %p89 = scmp.ne.s32.totalorder %s78, %s79
      %p90 = scmp.eq.s32.totalorder %s21, 0
      %p91 = por %p89, %p90
      %p92 = scmp.ne.s32.totalorder %s78, %s79
      %p93 = scmp.eq.s32.totalorder %s22, 7
      %p94 = por %p92, %p93
      %p96 = scmp.ne.s32.totalorder %s79, %s95
      %p97 = scmp.eq.s32.totalorder %s22, 0
      %p98 = por %p96, %p97
      %s99 = ssub.s32 %s24, %s38
      %p100 = scmp.eq.s32.totalorder %s99, 0
      %s102 = sadd.s32 %s101, 1
      %s103 = scalar_select %p100, %s101, %s102
      %p106 = pneg %p100
      %p107 = scmp.eq.s32.totalorder %s16, 7
      %p108 = por %p106, %p107
      %p109 = scmp.ne.s32.totalorder %s101, %s104
      %p110 = scmp.eq.s32.totalorder %s16, 0
      %p111 = por %p109, %p110
      %p112 = scmp.ne.s32.totalorder %s101, %s104
      %p113 = scmp.eq.s32.totalorder %s21, 7
      %p114 = por %p112, %p113
      %p115 = scmp.ne.s32.totalorder %s104, %s105
      %p116 = scmp.eq.s32.totalorder %s21, 0
      %p117 = por %p115, %p116
      %p118 = scmp.ne.s32.totalorder %s104, %s105
      %p119 = scmp.eq.s32.totalorder %s22, 7
      %p120 = por %p118, %p119
      %p122 = scmp.ne.s32.totalorder %s105, %s121
      %p123 = scmp.eq.s32.totalorder %s22, 0
      %p124 = por %p122, %p123
      %s125 = ssub.s32 %s23, %s42
      %s126 = ssub.s32 %s24, %s38
      %s127 = sor.u32 %s125, %s126
      %p128 = scmp.eq.s32.totalorder %s127, 0
      %s130 = sadd.s32 %s129, 1
      %s131 = scalar_select %p128, %s129, %s130
      %p134 = pneg %p128
      %p135 = scmp.eq.s32.totalorder %s16, 7
      %p136 = por %p134, %p135
      %p137 = scmp.ne.s32.totalorder %s129, %s132
      %p138 = scmp.eq.s32.totalorder %s16, 0
      %p139 = por %p137, %p138
      %p140 = scmp.ne.s32.totalorder %s129, %s132
      %p141 = scmp.eq.s32.totalorder %s21, 7
      %p142 = por %p140, %p141
      %p143 = scmp.ne.s32.totalorder %s132, %s133
      %p144 = scmp.eq.s32.totalorder %s21, 0
      %p145 = por %p143, %p144
      %p146 = scmp.ne.s32.totalorder %s132, %s133
      %p147 = scmp.eq.s32.totalorder %s22, 7
      %p148 = por %p146, %p147
      %p150 = scmp.ne.s32.totalorder %s133, %s149
      %p151 = scmp.eq.s32.totalorder %s22, 0
      %p152 = por %p150, %p151
      %p153 = scmp.le.s32.totalorder 1, %s16
      %p154 = scmp.lt.s32.totalorder %s16, 9
      %p155 = pnand %p153, %p154
      %p156 = pneg %p155
      // Predicated region
      $region9: #{tpu_custom_call.1} parent=5 // pred_check
        _
      $region10: #{tpu_custom_call.1} parent=5 // pred_check_branch
        %158 = sbr.rel (%p155) target = $region12
      $region11: #{tpu_custom_call.1} parent=5 // pred_region
        %s159 = ssub.s32 %s16, 1
        // Predicated region
        $region13: #{tpu_custom_call.1} parent=11 // pred_check
          %p160 = pneg %p63
        $region14: #{tpu_custom_call.1} parent=11 // pred_check_branch
          %162 = sbr.rel (%p160) target = $region16
        $region15: #{tpu_custom_call.1} parent=11 // pred_region
          %s163 = smul.u32 16, %s26
          %s165 = ssub.s32 1024, 1024
          %166 = vsyncadd [#allocation4], %s165
          %s167 = sadd.s32 %s28, %s163
          %s168 = smul.addr %s167, 64
          %s169 = scalar_lea.hbm %s0, %s168
          %s170 = sshll.u32 [#allocation3], 4
          %s171 = int_to_ptr.vmem [resolvable:$true] %s170
          %176 = dma.hbm_to_vmem [thread:$0]  %s169, 1024, %s171, [#allocation4], 64, 64, 4
        $region16: #{tpu_custom_call.1} parent=11 // pred_fallthru
          _
      $region12: #{tpu_custom_call.1} parent=5 // pred_fallthru
        _
      %p177 = scmp.lt.s32.totalorder %s16, 8
      // Predicated region
      $region17: #{tpu_custom_call.1} parent=5 // pred_check
        %p178 = pneg %p177
      $region18: #{tpu_custom_call.1} parent=5 // pred_check_branch
        %180 = sbr.rel (%p178) target = $region20
      $region19: #{tpu_custom_call.1} parent=5 // pred_region
        // Predicated region
        $region21: #{tpu_custom_call.1} parent=19 // pred_check
          %p181 = pneg %p85
        $region22: #{tpu_custom_call.1} parent=19 // pred_check_branch
          %183 = sbr.rel (%p181) target = $region24
        $region23: #{tpu_custom_call.1} parent=19 // pred_region
          %s184 = sand.u32 %s16, 1
          %s185 = scalar_lea.sflag [#allocation7], %s184
          %s186 = sand.u32 %s75, 1
          %s187 = smul.addr %s186, 128
          %s188 = scalar_lea.vmem [#allocation6], %s187
          %s189 = smul.u32 16, %s25
          %s190 = smul.u32 2, %s24
          %s192 = ssub.s32 2048, 2048
          %193 = vsyncadd %s185, %s192
          %s194 = smul.addr %s189, 16
          %s195 = sadd.s32 %s190, %s194
          %s196 = smul.addr %s195, 64
          %s197 = scalar_lea.hbm %s1, %s196
          %s198 = sshll.u32 %s188, 4
          %s199 = int_to_ptr.vmem [resolvable:$true] %s198
          %204 = dma.hbm_to_vmem [thread:$0]  %s197, 2048, %s199, %s185, 1024, 128, 8
        $region24: #{tpu_custom_call.1} parent=19 // pred_fallthru
          _
        // Predicated region
        $region25: #{tpu_custom_call.1} parent=19 // pred_check
          %p205 = pneg %p111
        $region26: #{tpu_custom_call.1} parent=19 // pred_check_branch
          %207 = sbr.rel (%p205) target = $region28
        $region27: #{tpu_custom_call.1} parent=19 // pred_region
          %s208 = sand.u32 %s16, 1
          %s209 = scalar_lea.sflag [#allocation7], %s208
          %s210 = sand.u32 %s101, 1
          %s211 = smul.addr %s210, 2
          %s212 = scalar_lea.vmem [#allocation8], %s211
          %s213 = smul.u32 2, %s24
          %s215 = ssub.s32 32, 32
          %216 = vsyncadd %s209, %s215
          %s217 = smul.addr %s213, 16
          %s218 = scalar_lea.hbm %s2, %s217
          %s220 = sshll.u32 %s212, 4
          %s221 = int_to_ptr.vmem [resolvable:$true] %s220
          %223 = dma.hbm_to_vmem [thread:$0]  %s218, 32, %s221, %s209
        $region28: #{tpu_custom_call.1} parent=19 // pred_fallthru
          _
      $region20: #{tpu_custom_call.1} parent=5 // pred_fallthru
        _
      %p224 = scmp.le.s32.totalorder 1, %s16
      %p225 = scmp.lt.s32.totalorder %s16, 9
      %p226 = pnand %p224, %p225
      %p227 = pneg %p226
      // Predicated region
      $region29: #{tpu_custom_call.1} parent=5 // pred_check
        _
      $region30: #{tpu_custom_call.1} parent=5 // pred_check_branch
        %229 = sbr.rel (%p226) target = $region32
      $region31: #{tpu_custom_call.1} parent=5 // pred_region
        %s230 = ssub.s32 %s16, 1
        // Predicated region
        $region33: #{tpu_custom_call.1} parent=31 // pred_check
          %p231 = pneg %p63
        $region34: #{tpu_custom_call.1} parent=31 // pred_check_branch
          %233 = sbr.rel (%p231) target = $region36
        $region35: #{tpu_custom_call.1} parent=31 // pred_region
          %234 = dma.done [#allocation4], 1024
        $region36: #{tpu_custom_call.1} parent=31 // pred_fallthru
          _
        %s235 = sand.u32 %s21, 1
        %s236 = scalar_lea.sflag [#allocation7], %s235
        %s237 = sand.u32 %s78, 1
        %s238 = smul.addr %s237, 128
        %s239 = scalar_lea.vmem [#allocation6], %s238
        // Predicated region
        $region37: #{tpu_custom_call.1} parent=31 // pred_check
          %p240 = pneg %p91
        $region38: #{tpu_custom_call.1} parent=31 // pred_check_branch
          %242 = sbr.rel (%p240) target = $region40
        $region39: #{tpu_custom_call.1} parent=31 // pred_region
          %243 = dma.done %s236, 2048
        $region40: #{tpu_custom_call.1} parent=31 // pred_fallthru
          _
        %s244 = sand.u32 %s21, 1
        %s245 = scalar_lea.sflag [#allocation7], %s244
        %s246 = sand.u32 %s104, 1
        %s247 = smul.addr %s246, 2
        %s248 = scalar_lea.vmem [#allocation8], %s247
        // Predicated region
        $region41: #{tpu_custom_call.1} parent=31 // pred_check
          %p249 = pneg %p117
        $region42: #{tpu_custom_call.1} parent=31 // pred_check_branch
          %251 = sbr.rel (%p249) target = $region44
        $region43: #{tpu_custom_call.1} parent=31 // pred_region
          %252 = dma.done %s245, 32
        $region44: #{tpu_custom_call.1} parent=31 // pred_fallthru
          _
        %p253 = pneg %p63
        %p254 = pneg %p60
        %s255 = sand.u32 %s21, 1
        %s256 = scalar_lea.sflag [#allocation7], %s255
        %s257 = sand.u32 %s78, 1
        %s258 = smul.addr %s257, 128
        %s259 = scalar_lea.vmem [#allocation6], %s258
        %p260 = pneg %p91
        %p261 = pneg %p88
        %s262 = sand.u32 %s21, 1
        %s263 = scalar_lea.sflag [#allocation7], %s262
        %s264 = sand.u32 %s104, 1
        %s265 = smul.addr %s264, 2
        %s266 = scalar_lea.vmem [#allocation8], %s265
        %p267 = pneg %p117
        %p268 = pneg %p114
        %p269 = pneg %p145
        %p270 = pneg %p142
        %s271 = sand.u32 %s132, 1
        %s272 = scalar_lea.sflag [#allocation5], %s271
        %s273 = sand.u32 %s132, 1
        %s274 = smul.addr %s273, 256
        %s275 = scalar_lea.vmem [#allocation9], %s274
        %s276 = smul.u32 16, %s26
        %s277 = smul.u32 16, %s28
        %s278 = smul.u32 2, %s27
        %s279 = smul.u32 2, %s27
        %s280 = smul.u32 16, %s26
        %s281 = smul.u32 2, %s27
        %p283 = scmp.eq.s32.totalorder %s28, 0
        // Predicated region
        $region45: #{tpu_custom_call.1} parent=31 // pred_check
          %p284 = pneg %p283
        $region46: #{tpu_custom_call.1} parent=31 // pred_check_branch
          %286 = sbr.rel (%p284) target = $region48
        $region47: #{tpu_custom_call.1} parent=31 // pred_region
          %287 = vst [vmem:[#allocation2] sm:$0xff] 0.0
          %288 = vst [vmem:[#allocation2 + $0x8] sm:$0xff] 0.0
          %289 = vst [vmem:[#allocation2 + $0x10] sm:$0xff] 0.0
          %290 = vst [vmem:[#allocation2 + $0x18] sm:$0xff] 0.0
          %291 = vst [vmem:[#allocation2 + $0x20] sm:$0xff] 0.0
          %292 = vst [vmem:[#allocation2 + $0x28] sm:$0xff] 0.0
          %293 = vst [vmem:[#allocation2 + $0x30] sm:$0xff] 0.0
          %294 = vst [vmem:[#allocation2 + $0x38] sm:$0xff] 0.0
          %295 = vst [vmem:[#allocation2 + $0x40] sm:$0xff] 0.0
          %296 = vst [vmem:[#allocation2 + $0x48] sm:$0xff] 0.0
          %297 = vst [vmem:[#allocation2 + $0x50] sm:$0xff] 0.0
          %298 = vst [vmem:[#allocation2 + $0x58] sm:$0xff] 0.0
          %299 = vst [vmem:[#allocation2 + $0x60] sm:$0xff] 0.0
          %300 = vst [vmem:[#allocation2 + $0x68] sm:$0xff] 0.0
          %301 = vst [vmem:[#allocation2 + $0x70] sm:$0xff] 0.0
          %302 = vst [vmem:[#allocation2 + $0x78] sm:$0xff] 0.0
          %303 = vst [vmem:[#allocation2 + $0x80] sm:$0xff] 0.0
          %304 = vst [vmem:[#allocation2 + $0x88] sm:$0xff] 0.0
          %305 = vst [vmem:[#allocation2 + $0x90] sm:$0xff] 0.0
          %306 = vst [vmem:[#allocation2 + $0x98] sm:$0xff] 0.0
          %307 = vst [vmem:[#allocation2 + $0xa0] sm:$0xff] 0.0
          %308 = vst [vmem:[#allocation2 + $0xa8] sm:$0xff] 0.0
          %309 = vst [vmem:[#allocation2 + $0xb0] sm:$0xff] 0.0
          %310 = vst [vmem:[#allocation2 + $0xb8] sm:$0xff] 0.0
          %311 = vst [vmem:[#allocation2 + $0xc0] sm:$0xff] 0.0
          %312 = vst [vmem:[#allocation2 + $0xc8] sm:$0xff] 0.0
          %313 = vst [vmem:[#allocation2 + $0xd0] sm:$0xff] 0.0
          %314 = vst [vmem:[#allocation2 + $0xd8] sm:$0xff] 0.0
          %315 = vst [vmem:[#allocation2 + $0xe0] sm:$0xff] 0.0
          %316 = vst [vmem:[#allocation2 + $0xe8] sm:$0xff] 0.0
          %317 = vst [vmem:[#allocation2 + $0xf0] sm:$0xff] 0.0
          %318 = vst [vmem:[#allocation2 + $0xf8] sm:$0xff] 0.0
        $region48: #{tpu_custom_call.1} parent=31 // pred_fallthru
          _
        %v319 = vld [vmem:[#allocation2] sm:$0xff]
        %v320 = vld [vmem:[#allocation2 + $0x8] sm:$0xff]
        %v321 = vld [vmem:[#allocation2 + $0x10] sm:$0xff]
        %v322 = vld [vmem:[#allocation2 + $0x18] sm:$0xff]
        %v323 = vld [vmem:[#allocation2 + $0x20] sm:$0xff]
        %v324 = vld [vmem:[#allocation2 + $0x28] sm:$0xff]
        %v325 = vld [vmem:[#allocation2 + $0x30] sm:$0xff]
        %v326 = vld [vmem:[#allocation2 + $0x38] sm:$0xff]
        %v327 = vld [vmem:[#allocation2 + $0x40] sm:$0xff]
        %v328 = vld [vmem:[#allocation2 + $0x48] sm:$0xff]
        %v329 = vld [vmem:[#allocation2 + $0x50] sm:$0xff]
        %v330 = vld [vmem:[#allocation2 + $0x58] sm:$0xff]
        %v331 = vld [vmem:[#allocation2 + $0x60] sm:$0xff]
        %v332 = vld [vmem:[#allocation2 + $0x68] sm:$0xff]
        %v333 = vld [vmem:[#allocation2 + $0x70] sm:$0xff]
        %v334 = vld [vmem:[#allocation2 + $0x78] sm:$0xff]
        %v335 = vld [vmem:[#allocation2 + $0x80] sm:$0xff]
        %v336 = vld [vmem:[#allocation2 + $0x88] sm:$0xff]
        %v337 = vld [vmem:[#allocation2 + $0x90] sm:$0xff]
        %v338 = vld [vmem:[#allocation2 + $0x98] sm:$0xff]
        %v339 = vld [vmem:[#allocation2 + $0xa0] sm:$0xff]
        %v340 = vld [vmem:[#allocation2 + $0xa8] sm:$0xff]
        %v341 = vld [vmem:[#allocation2 + $0xb0] sm:$0xff]
        %v342 = vld [vmem:[#allocation2 + $0xb8] sm:$0xff]
        %v343 = vld [vmem:[#allocation2 + $0xc0] sm:$0xff]
        %v344 = vld [vmem:[#allocation2 + $0xc8] sm:$0xff]
        %v345 = vld [vmem:[#allocation2 + $0xd0] sm:$0xff]
        %v346 = vld [vmem:[#allocation2 + $0xd8] sm:$0xff]
        %v347 = vld [vmem:[#allocation2 + $0xe0] sm:$0xff]
        %v348 = vld [vmem:[#allocation2 + $0xe8] sm:$0xff]
        %v349 = vld [vmem:[#allocation2 + $0xf0] sm:$0xff]
        %v350 = vld [vmem:[#allocation2 + $0xf8] sm:$0xff]
        %v351 = vld [vmem:[#allocation3] sm:$0xf]
        %v352 = vld [vmem:[#allocation3 + $0x4] sm:$0xf]
        %v353 = vld [vmem:[#allocation3 + $0x8] sm:$0xf]
        %v354 = vld [vmem:[#allocation3 + $0xc] sm:$0xf]
        %v355 = vld [vmem:[#allocation3 + $0x10] sm:$0xf]
        %v356 = vld [vmem:[#allocation3 + $0x14] sm:$0xf]
        %v357 = vld [vmem:[#allocation3 + $0x18] sm:$0xf]
        %v358 = vld [vmem:[#allocation3 + $0x1c] sm:$0xf]
        %v359 = vld [vmem:[#allocation3 + $0x20] sm:$0xf]
        %v360 = vld [vmem:[#allocation3 + $0x24] sm:$0xf]
        %v361 = vld [vmem:[#allocation3 + $0x28] sm:$0xf]
        %v362 = vld [vmem:[#allocation3 + $0x2c] sm:$0xf]
        %v363 = vld [vmem:[#allocation3 + $0x30] sm:$0xf]
        %v364 = vld [vmem:[#allocation3 + $0x34] sm:$0xf]
        %v365 = vld [vmem:[#allocation3 + $0x38] sm:$0xf]
        %v366 = vld [vmem:[#allocation3 + $0x3c] sm:$0xf]
        %v367 = vld [vmem:[%s239] sm:$0xff]
        %v368 = vld [vmem:[%s239 + $0x8] sm:$0xff]
        %v369 = vld [vmem:[%s239 + $0x10] sm:$0xff]
        %v370 = vld [vmem:[%s239 + $0x18] sm:$0xff]
        %v371 = vld [vmem:[%s239 + $0x20] sm:$0xff]
        %v372 = vld [vmem:[%s239 + $0x28] sm:$0xff]
        %v373 = vld [vmem:[%s239 + $0x30] sm:$0xff]
        %v374 = vld [vmem:[%s239 + $0x38] sm:$0xff]
        %v375 = vld [vmem:[%s239 + $0x40] sm:$0xff]
        %v376 = vld [vmem:[%s239 + $0x48] sm:$0xff]
        %v377 = vld [vmem:[%s239 + $0x50] sm:$0xff]
        %v378 = vld [vmem:[%s239 + $0x58] sm:$0xff]
        %v379 = vld [vmem:[%s239 + $0x60] sm:$0xff]
        %v380 = vld [vmem:[%s239 + $0x68] sm:$0xff]
        %v381 = vld [vmem:[%s239 + $0x70] sm:$0xff]
        %v382 = vld [vmem:[%s239 + $0x78] sm:$0xff]
        %v399 = vunpack.c.l.b16 %v351
        %v400 = vunpack.c.l.b16 %v352
        %v401 = vunpack.c.l.b16 %v353
        %v402 = vunpack.c.l.b16 %v354
        %v403 = vunpack.c.l.b16 %v355
        %v404 = vunpack.c.l.b16 %v356
        %v405 = vunpack.c.l.b16 %v357
        %v406 = vunpack.c.l.b16 %v358
        %v407 = vunpack.c.l.b16 %v359
        %v408 = vunpack.c.l.b16 %v360
        %v409 = vunpack.c.l.b16 %v361
        %v410 = vunpack.c.l.b16 %v362
        %v411 = vunpack.c.l.b16 %v363
        %v412 = vunpack.c.l.b16 %v364
        %v413 = vunpack.c.l.b16 %v365
        %v414 = vunpack.c.l.b16 %v366
        %v415 = vpack.c.b16 %v400, %v399
        %v416 = vpack.c.b16 %v402, %v401
        %v417 = vpack.c.b16 %v404, %v403
        %v418 = vpack.c.b16 %v406, %v405
        %v419 = vpack.c.b16 %v408, %v407
        %v420 = vpack.c.b16 %v410, %v409
        %v421 = vpack.c.b16 %v412, %v411
        %v422 = vpack.c.b16 %v414, %v413
        %v447 = vunpack.c.l.b16 %v367
        %v448 = vunpack.c.h.b16 %v367
        %v449 = vunpack.c.l.b16 %v368
        %v450 = vunpack.c.h.b16 %v368
        %v451 = vunpack.c.l.b16 %v369
        %v452 = vunpack.c.h.b16 %v369
        %v453 = vunpack.c.l.b16 %v370
        %v454 = vunpack.c.h.b16 %v370
        %v455 = vunpack.c.l.b16 %v371
        %v456 = vunpack.c.h.b16 %v371
        %v457 = vunpack.c.l.b16 %v372
        %v458 = vunpack.c.h.b16 %v372
        %v459 = vunpack.c.l.b16 %v373
        %v460 = vunpack.c.h.b16 %v373
        %v461 = vunpack.c.l.b16 %v374
        %v462 = vunpack.c.h.b16 %v374
        %v463 = vunpack.c.l.b16 %v375
        %v464 = vunpack.c.h.b16 %v375
        %v465 = vunpack.c.l.b16 %v376
        %v466 = vunpack.c.h.b16 %v376
        %v467 = vunpack.c.l.b16 %v377
        %v468 = vunpack.c.h.b16 %v377
        %v469 = vunpack.c.l.b16 %v378
        %v470 = vunpack.c.h.b16 %v378
        %v471 = vunpack.c.l.b16 %v379
        %v472 = vunpack.c.h.b16 %v379
        %v473 = vunpack.c.l.b16 %v380
        %v474 = vunpack.c.h.b16 %v380
        %v475 = vunpack.c.l.b16 %v381
        %v476 = vunpack.c.h.b16 %v381
        %v477 = vunpack.c.l.b16 %v382
        %v478 = vunpack.c.h.b16 %v382
        %v479 = vpack.c.b16 %v449, %v447
        %v480 = vpack.c.b16 %v450, %v448
        %v481 = vpack.c.b16 %v453, %v451
        %v482 = vpack.c.b16 %v454, %v452
        %v483 = vpack.c.b16 %v457, %v455
        %v484 = vpack.c.b16 %v458, %v456
        %v485 = vpack.c.b16 %v461, %v459
        %v486 = vpack.c.b16 %v462, %v460
        %v487 = vpack.c.b16 %v465, %v463
        %v488 = vpack.c.b16 %v466, %v464
        %v489 = vpack.c.b16 %v469, %v467
        %v490 = vpack.c.b16 %v470, %v468
        %v491 = vpack.c.b16 %v473, %v471
        %v492 = vpack.c.b16 %v474, %v472
        %v493 = vpack.c.b16 %v477, %v475
        %v494 = vpack.c.b16 %v478, %v476
        %511 = vmatprep.subr.bf16.mxu0 %v480
        %512 = vmatpush1.bf16.msra.mxu0 %v479
        %513 = vmatprep.subr.bf16.mxu0 %v482
        %514 = vmatpush1.bf16.msra.mxu0 %v481
        %515 = vmatprep.subr.bf16.mxu0 %v484
        %516 = vmatpush1.bf16.msra.mxu0 %v483
        %517 = vmatprep.subr.bf16.mxu0 %v486
        %518 = vmatpush1.bf16.msra.mxu0 %v485
        %519 = vmatprep.subr.bf16.mxu0 %v488
        %520 = vmatpush1.bf16.msra.mxu0 %v487
        %521 = vmatprep.subr.bf16.mxu0 %v490
        %522 = vmatpush1.bf16.msra.mxu0 %v489
        %523 = vmatprep.subr.bf16.mxu0 %v492
        %524 = vmatpush1.bf16.msra.mxu0 %v491
        %525 = vmatprep.subr.bf16.mxu0 %v494
        %526 = vmatpush1.bf16.msra.mxu0 %v493
        %527 = vmatprep.subr.bf16.mxu0 0
        %528 = vmatpush1.bf16.msra.mxu0 0
        %529 = vmatprep.subr.bf16.mxu0 0
        %530 = vmatpush1.bf16.msra.mxu0 0
        %531 = vmatprep.subr.bf16.mxu0 0
        %532 = vmatpush1.bf16.msra.mxu0 0
        %533 = vmatprep.subr.bf16.mxu0 0
        %534 = vmatpush1.bf16.msra.mxu0 0
        %535 = vmatprep.subr.bf16.mxu0 0
        %536 = vmatpush1.bf16.msra.mxu0 0
        %537 = vmatprep.subr.bf16.mxu0 0
        %538 = vmatpush1.bf16.msra.mxu0 0
        %539 = vmatprep.subr.bf16.mxu0 0
        %540 = vmatpush1.bf16.msra.mxu0 0
        %541 = vmatprep.subr.bf16.mxu0 0
        %542 = vmatpush1.bf16.msra.mxu0 0
        %543 = vmatprep.mubr.bf16.mxu0 0
        %544 = vmatmul.mubr.bf16.gmra.mrb[0].mxu0 %v415
        %v545 = vpop.f32.mrb[0].mxu0
        %v546 = vadd.f32 0.0, %v545
        %v547 = vpop.f32.mrb[0].mxu0
        %v548 = vadd.f32 0.0, %v547
        %v549 = vpop.f32.mrb[0].mxu0
        %v550 = vadd.f32 0.0, %v549
        %v551 = vpop.f32.mrb[0].mxu0
        %v552 = vadd.f32 0.0, %v551
        %553 = vmatprep.mubr.bf16.mxu0 0
        %554 = vmatmul.mubr.bf16.gmra.mrb[0].mxu0 %v416
        %v555 = vpop.f32.mrb[0].mxu0
        %v556 = vadd.f32 0.0, %v555
        %v557 = vpop.f32.mrb[0].mxu0
        %v558 = vadd.f32 0.0, %v557
        %v559 = vpop.f32.mrb[0].mxu0
        %v560 = vadd.f32 0.0, %v559
        %v561 = vpop.f32.mrb[0].mxu0
        %v562 = vadd.f32 0.0, %v561
        %563 = vmatprep.mubr.bf16.mxu0 0
        %564 = vmatmul.mubr.bf16.gmra.mrb[0].mxu0 %v417
        %v565 = vpop.f32.mrb[0].mxu0
        %v566 = vadd.f32 0.0, %v565
        %v567 = vpop.f32.mrb[0].mxu0
        %v568 = vadd.f32 0.0, %v567
        %v569 = vpop.f32.mrb[0].mxu0
        %v570 = vadd.f32 0.0, %v569
        %v571 = vpop.f32.mrb[0].mxu0
        %v572 = vadd.f32 0.0, %v571
        %573 = vmatprep.mubr.bf16.mxu0 0
        %574 = vmatmul.mubr.bf16.gmra.mrb[0].mxu0 %v418
        %v575 = vpop.f32.mrb[0].mxu0
        %v576 = vadd.f32 0.0, %v575
        %v577 = vpop.f32.mrb[0].mxu0
        %v578 = vadd.f32 0.0, %v577
        %v579 = vpop.f32.mrb[0].mxu0
        %v580 = vadd.f32 0.0, %v579
        %v581 = vpop.f32.mrb[0].mxu0
        %v582 = vadd.f32 0.0, %v581
        %583 = vmatprep.mubr.bf16.mxu0 0
        %584 = vmatmul.mubr.bf16.gmra.mrb[0].mxu0 %v419
        %v585 = vpop.f32.mrb[0].mxu0
        %v586 = vadd.f32 0.0, %v585
        %v587 = vpop.f32.mrb[0].mxu0
        %v588 = vadd.f32 0.0, %v587
        %v589 = vpop.f32.mrb[0].mxu0
        %v590 = vadd.f32 0.0, %v589
        %v591 = vpop.f32.mrb[0].mxu0
        %v592 = vadd.f32 0.0, %v591
        %593 = vmatprep.mubr.bf16.mxu0 0
        %594 = vmatmul.mubr.bf16.gmra.mrb[0].mxu0 %v420
        %v595 = vpop.f32.mrb[0].mxu0
        %v596 = vadd.f32 0.0, %v595
        %v597 = vpop.f32.mrb[0].mxu0
        %v598 = vadd.f32 0.0, %v597
        %v599 = vpop.f32.mrb[0].mxu0
        %v600 = vadd.f32 0.0, %v599
        %v601 = vpop.f32.mrb[0].mxu0
        %v602 = vadd.f32 0.0, %v601
        %603 = vmatprep.mubr.bf16.mxu0 0
        %604 = vmatmul.mubr.bf16.gmra.mrb[0].mxu0 %v421
        %v605 = vpop.f32.mrb[0].mxu0
        %v606 = vadd.f32 0.0, %v605
        %v607 = vpop.f32.mrb[0].mxu0
        %v608 = vadd.f32 0.0, %v607
        %v609 = vpop.f32.mrb[0].mxu0
        %v610 = vadd.f32 0.0, %v609
        %v611 = vpop.f32.mrb[0].mxu0
        %v612 = vadd.f32 0.0, %v611
        %613 = vmatprep.mubr.bf16.mxu0 0
        %614 = vmatmul.mubr.bf16.gmra.mrb[0].mxu0 %v422
        %v615 = vpop.f32.mrb[0].mxu0
        %v616 = vadd.f32 0.0, %v615
        %v617 = vpop.f32.mrb[0].mxu0
        %v618 = vadd.f32 0.0, %v617
        %v619 = vpop.f32.mrb[0].mxu0
        %v620 = vadd.f32 0.0, %v619
        %v621 = vpop.f32.mrb[0].mxu0
        %v622 = vadd.f32 0.0, %v621
        %623 = vdwg.mxu0
        %v624 = vadd.f32 %v319, %v546
        %v625 = vadd.f32 %v320, %v548
        %v626 = vadd.f32 %v321, %v550
        %v627 = vadd.f32 %v322, %v552
        %v628 = vadd.f32 %v323, %v556
        %v629 = vadd.f32 %v324, %v558
        %v630 = vadd.f32 %v325, %v560
        %v631 = vadd.f32 %v326, %v562
        %v632 = vadd.f32 %v327, %v566
        %v633 = vadd.f32 %v328, %v568
        %v634 = vadd.f32 %v329, %v570
        %v635 = vadd.f32 %v330, %v572
        %v636 = vadd.f32 %v331, %v576
        %v637 = vadd.f32 %v332, %v578
        %v638 = vadd.f32 %v333, %v580
        %v639 = vadd.f32 %v334, %v582
        %v640 = vadd.f32 %v335, %v586
        %v641 = vadd.f32 %v336, %v588
        %v642 = vadd.f32 %v337, %v590
        %v643 = vadd.f32 %v338, %v592
        %v644 = vadd.f32 %v339, %v596
        %v645 = vadd.f32 %v340, %v598
        %v646 = vadd.f32 %v341, %v600
        %v647 = vadd.f32 %v342, %v602
        %v648 = vadd.f32 %v343, %v606
        %v649 = vadd.f32 %v344, %v608
        %v650 = vadd.f32 %v345, %v610
        %v651 = vadd.f32 %v346, %v612
        %v652 = vadd.f32 %v347, %v616
        %v653 = vadd.f32 %v348, %v618
        %v654 = vadd.f32 %v349, %v620
        %v655 = vadd.f32 %v350, %v622
        %656 = vst [vmem:[#allocation2] sm:$0xff] %v624
        %657 = vst [vmem:[#allocation2 + $0x8] sm:$0xff] %v625
        %658 = vst [vmem:[#allocation2 + $0x10] sm:$0xff] %v626
        %659 = vst [vmem:[#allocation2 + $0x18] sm:$0xff] %v627
        %660 = vst [vmem:[#allocation2 + $0x20] sm:$0xff] %v628
        %661 = vst [vmem:[#allocation2 + $0x28] sm:$0xff] %v629
        %662 = vst [vmem:[#allocation2 + $0x30] sm:$0xff] %v630
        %663 = vst [vmem:[#allocation2 + $0x38] sm:$0xff] %v631
        %664 = vst [vmem:[#allocation2 + $0x40] sm:$0xff] %v632
        %665 = vst [vmem:[#allocation2 + $0x48] sm:$0xff] %v633
        %666 = vst [vmem:[#allocation2 + $0x50] sm:$0xff] %v634
        %667 = vst [vmem:[#allocation2 + $0x58] sm:$0xff] %v635
        %668 = vst [vmem:[#allocation2 + $0x60] sm:$0xff] %v636
        %669 = vst [vmem:[#allocation2 + $0x68] sm:$0xff] %v637
        %670 = vst [vmem:[#allocation2 + $0x70] sm:$0xff] %v638
        %671 = vst [vmem:[#allocation2 + $0x78] sm:$0xff] %v639
        %672 = vst [vmem:[#allocation2 + $0x80] sm:$0xff] %v640
        %673 = vst [vmem:[#allocation2 + $0x88] sm:$0xff] %v641
        %674 = vst [vmem:[#allocation2 + $0x90] sm:$0xff] %v642
        %675 = vst [vmem:[#allocation2 + $0x98] sm:$0xff] %v643
        %676 = vst [vmem:[#allocation2 + $0xa0] sm:$0xff] %v644
        %677 = vst [vmem:[#allocation2 + $0xa8] sm:$0xff] %v645
        %678 = vst [vmem:[#allocation2 + $0xb0] sm:$0xff] %v646
        %679 = vst [vmem:[#allocation2 + $0xb8] sm:$0xff] %v647
        %680 = vst [vmem:[#allocation2 + $0xc0] sm:$0xff] %v648
        %681 = vst [vmem:[#allocation2 + $0xc8] sm:$0xff] %v649
        %682 = vst [vmem:[#allocation2 + $0xd0] sm:$0xff] %v650
        %683 = vst [vmem:[#allocation2 + $0xd8] sm:$0xff] %v651
        %684 = vst [vmem:[#allocation2 + $0xe0] sm:$0xff] %v652
        %685 = vst [vmem:[#allocation2 + $0xe8] sm:$0xff] %v653
        %686 = vst [vmem:[#allocation2 + $0xf0] sm:$0xff] %v654
        %687 = vst [vmem:[#allocation2 + $0xf8] sm:$0xff] %v655
        // Predicated region
        $region49: #{tpu_custom_call.1} parent=31 // pred_check
          %p688 = pneg %p283
        $region50: #{tpu_custom_call.1} parent=31 // pred_check_branch
          %690 = sbr.rel (%p688) target = $region52
        $region51: #{tpu_custom_call.1} parent=31 // pred_region
          %v691 = vld [vmem:[#allocation2] sm:$0xff]
          %v692 = vld [vmem:[#allocation2 + $0x8] sm:$0xff]
          %v693 = vld [vmem:[#allocation2 + $0x10] sm:$0xff]
          %v694 = vld [vmem:[#allocation2 + $0x18] sm:$0xff]
          %v695 = vld [vmem:[#allocation2 + $0x20] sm:$0xff]
          %v696 = vld [vmem:[#allocation2 + $0x28] sm:$0xff]
          %v697 = vld [vmem:[#allocation2 + $0x30] sm:$0xff]
          %v698 = vld [vmem:[#allocation2 + $0x38] sm:$0xff]
          %v699 = vld [vmem:[#allocation2 + $0x40] sm:$0xff]
          %v700 = vld [vmem:[#allocation2 + $0x48] sm:$0xff]
          %v701 = vld [vmem:[#allocation2 + $0x50] sm:$0xff]
          %v702 = vld [vmem:[#allocation2 + $0x58] sm:$0xff]
          %v703 = vld [vmem:[#allocation2 + $0x60] sm:$0xff]
          %v704 = vld [vmem:[#allocation2 + $0x68] sm:$0xff]
          %v705 = vld [vmem:[#allocation2 + $0x70] sm:$0xff]
          %v706 = vld [vmem:[#allocation2 + $0x78] sm:$0xff]
          %v707 = vld [vmem:[#allocation2 + $0x80] sm:$0xff]
          %v708 = vld [vmem:[#allocation2 + $0x88] sm:$0xff]
          %v709 = vld [vmem:[#allocation2 + $0x90] sm:$0xff]
          %v710 = vld [vmem:[#allocation2 + $0x98] sm:$0xff]
          %v711 = vld [vmem:[#allocation2 + $0xa0] sm:$0xff]
          %v712 = vld [vmem:[#allocation2 + $0xa8] sm:$0xff]
          %v713 = vld [vmem:[#allocation2 + $0xb0] sm:$0xff]
          %v714 = vld [vmem:[#allocation2 + $0xb8] sm:$0xff]
          %v715 = vld [vmem:[#allocation2 + $0xc0] sm:$0xff]
          %v716 = vld [vmem:[#allocation2 + $0xc8] sm:$0xff]
          %v717 = vld [vmem:[#allocation2 + $0xd0] sm:$0xff]
          %v718 = vld [vmem:[#allocation2 + $0xd8] sm:$0xff]
          %v719 = vld [vmem:[#allocation2 + $0xe0] sm:$0xff]
          %v720 = vld [vmem:[#allocation2 + $0xe8] sm:$0xff]
          %v721 = vld [vmem:[#allocation2 + $0xf0] sm:$0xff]
          %v722 = vld [vmem:[#allocation2 + $0xf8] sm:$0xff]
          %v723 = vld [vmem:[%s248] sm:$0x3]
          %v725 = vlaneseq
          %v726 = vshrl.u32 %v725, 7
          %v727 = vsub.s32 0, %v726
          %v728 = vrot.slane %v723, %v727
          %v729 = vlaneseq
          %v730 = vshrl.u32 %v729, 7
          %v731 = vsub.s32 1, %v730
          %v732 = vrot.slane %v723, %v731
          %v735 = vadd.f32 %v691, %v728
          %v736 = vadd.f32 %v692, %v732
          %v737 = vadd.f32 %v693, %v728
          %v738 = vadd.f32 %v694, %v732
          %v739 = vadd.f32 %v695, %v728
          %v740 = vadd.f32 %v696, %v732
          %v741 = vadd.f32 %v697, %v728
          %v742 = vadd.f32 %v698, %v732
          %v743 = vadd.f32 %v699, %v728
          %v744 = vadd.f32 %v700, %v732
          %v745 = vadd.f32 %v701, %v728
          %v746 = vadd.f32 %v702, %v732
          %v747 = vadd.f32 %v703, %v728
          %v748 = vadd.f32 %v704, %v732
          %v749 = vadd.f32 %v705, %v728
          %v750 = vadd.f32 %v706, %v732
          %v751 = vadd.f32 %v707, %v728
          %v752 = vadd.f32 %v708, %v732
          %v753 = vadd.f32 %v709, %v728
          %v754 = vadd.f32 %v710, %v732
          %v755 = vadd.f32 %v711, %v728
          %v756 = vadd.f32 %v712, %v732
          %v757 = vadd.f32 %v713, %v728
          %v758 = vadd.f32 %v714, %v732
          %v759 = vadd.f32 %v715, %v728
          %v760 = vadd.f32 %v716, %v732
          %v761 = vadd.f32 %v717, %v728
          %v762 = vadd.f32 %v718, %v732
          %v763 = vadd.f32 %v719, %v728
          %v764 = vadd.f32 %v720, %v732
          %v765 = vadd.f32 %v721, %v728
          %v766 = vadd.f32 %v722, %v732
          %v767 = vmax.f32 %v735, 0.0
          %v768 = vmax.f32 %v736, 0.0
          %v769 = vmax.f32 %v737, 0.0
          %v770 = vmax.f32 %v738, 0.0
          %v771 = vmax.f32 %v739, 0.0
          %v772 = vmax.f32 %v740, 0.0
          %v773 = vmax.f32 %v741, 0.0
          %v774 = vmax.f32 %v742, 0.0
          %v775 = vmax.f32 %v743, 0.0
          %v776 = vmax.f32 %v744, 0.0
          %v777 = vmax.f32 %v745, 0.0
          %v778 = vmax.f32 %v746, 0.0
          %v779 = vmax.f32 %v747, 0.0
          %v780 = vmax.f32 %v748, 0.0
          %v781 = vmax.f32 %v749, 0.0
          %v782 = vmax.f32 %v750, 0.0
          %v783 = vmax.f32 %v751, 0.0
          %v784 = vmax.f32 %v752, 0.0
          %v785 = vmax.f32 %v753, 0.0
          %v786 = vmax.f32 %v754, 0.0
          %v787 = vmax.f32 %v755, 0.0
          %v788 = vmax.f32 %v756, 0.0
          %v789 = vmax.f32 %v757, 0.0
          %v790 = vmax.f32 %v758, 0.0
          %v791 = vmax.f32 %v759, 0.0
          %v792 = vmax.f32 %v760, 0.0
          %v793 = vmax.f32 %v761, 0.0
          %v794 = vmax.f32 %v762, 0.0
          %v795 = vmax.f32 %v763, 0.0
          %v796 = vmax.f32 %v764, 0.0
          %v797 = vmax.f32 %v765, 0.0
          %v798 = vmax.f32 %v766, 0.0
          %799 = vst [vmem:[%s275] sm:$0xff] %v767
          %800 = vst [vmem:[%s275 + $0x8] sm:$0xff] %v768
          %801 = vst [vmem:[%s275 + $0x10] sm:$0xff] %v769
          %802 = vst [vmem:[%s275 + $0x18] sm:$0xff] %v770
          %803 = vst [vmem:[%s275 + $0x20] sm:$0xff] %v771
          %804 = vst [vmem:[%s275 + $0x28] sm:$0xff] %v772
          %805 = vst [vmem:[%s275 + $0x30] sm:$0xff] %v773
          %806 = vst [vmem:[%s275 + $0x38] sm:$0xff] %v774
          %807 = vst [vmem:[%s275 + $0x40] sm:$0xff] %v775
          %808 = vst [vmem:[%s275 + $0x48] sm:$0xff] %v776
          %809 = vst [vmem:[%s275 + $0x50] sm:$0xff] %v777
          %810 = vst [vmem:[%s275 + $0x58] sm:$0xff] %v778
          %811 = vst [vmem:[%s275 + $0x60] sm:$0xff] %v779
          %812 = vst [vmem:[%s275 + $0x68] sm:$0xff] %v780
          %813 = vst [vmem:[%s275 + $0x70] sm:$0xff] %v781
          %814 = vst [vmem:[%s275 + $0x78] sm:$0xff] %v782
          %815 = vst [vmem:[%s275 + $0x80] sm:$0xff] %v783
          %816 = vst [vmem:[%s275 + $0x88] sm:$0xff] %v784
          %817 = vst [vmem:[%s275 + $0x90] sm:$0xff] %v785
          %818 = vst [vmem:[%s275 + $0x98] sm:$0xff] %v786
          %819 = vst [vmem:[%s275 + $0xa0] sm:$0xff] %v787
          %820 = vst [vmem:[%s275 + $0xa8] sm:$0xff] %v788
          %821 = vst [vmem:[%s275 + $0xb0] sm:$0xff] %v789
          %822 = vst [vmem:[%s275 + $0xb8] sm:$0xff] %v790
          %823 = vst [vmem:[%s275 + $0xc0] sm:$0xff] %v791
          %824 = vst [vmem:[%s275 + $0xc8] sm:$0xff] %v792
          %825 = vst [vmem:[%s275 + $0xd0] sm:$0xff] %v793
          %826 = vst [vmem:[%s275 + $0xd8] sm:$0xff] %v794
          %827 = vst [vmem:[%s275 + $0xe0] sm:$0xff] %v795
          %828 = vst [vmem:[%s275 + $0xe8] sm:$0xff] %v796
          %829 = vst [vmem:[%s275 + $0xf0] sm:$0xff] %v797
          %830 = vst [vmem:[%s275 + $0xf8] sm:$0xff] %v798
        $region52: #{tpu_custom_call.1} parent=31 // pred_fallthru
          _
        %s831 = sand.u32 %s132, 1
        %s832 = scalar_lea.sflag [#allocation5], %s831
        %s833 = sand.u32 %s132, 1
        %s834 = smul.addr %s833, 256
        %s835 = scalar_lea.vmem [#allocation9], %s834
        // Predicated region
        $region53: #{tpu_custom_call.1} parent=31 // pred_check
          %p836 = pneg %p142
        $region54: #{tpu_custom_call.1} parent=31 // pred_check_branch
          %838 = sbr.rel (%p836) target = $region56
        $region55: #{tpu_custom_call.1} parent=31 // pred_region
          %s839 = smul.u32 16, %s26
          %s840 = smul.u32 2, %s27
          %s842 = ssub.s32 4096, 4096
          %843 = vsyncadd %s832, %s842
          %s844 = smul.addr %s839, 16
          %s845 = sadd.s32 %s840, %s844
          %s846 = smul.addr %s845, 128
          %s847 = scalar_lea.hbm %s3, %s846
          %s848 = sshll.u32 %s835, 4
          %s849 = int_to_ptr.vmem [resolvable:$true] %s848
          %854 = dma.vmem_to_hbm [thread:$0]  %s849, 4096, %s847, %s832, 256, 2048, 16
        $region56: #{tpu_custom_call.1} parent=31 // pred_fallthru
          _
      $region32: #{tpu_custom_call.1} parent=5 // pred_fallthru
        _
      %p855 = scmp.le.s32.totalorder 2, %s16
      // Predicated region
      $region57: #{tpu_custom_call.1} parent=5 // pred_check
        %p856 = pneg %p855
      $region58: #{tpu_custom_call.1} parent=5 // pred_check_branch
        %858 = sbr.rel (%p856) target = $region60
      $region59: #{tpu_custom_call.1} parent=5 // pred_region
        %s859 = ssub.s32 %s16, 2
        // Predicated region
        $region61: #{tpu_custom_call.1} parent=59 // pred_check
          %p860 = pneg %p148
        $region62: #{tpu_custom_call.1} parent=59 // pred_check_branch
          %862 = sbr.rel (%p860) target = $region64
        $region63: #{tpu_custom_call.1} parent=59 // pred_region
          %s863 = sand.u32 %s133, 1
          %s864 = scalar_lea.sflag [#allocation5], %s863
          %s865 = sand.u32 %s133, 1
          %s866 = smul.addr %s865, 256
          %s867 = scalar_lea.vmem [#allocation9], %s866
          %868 = dma.done %s864, 4096
        $region64: #{tpu_custom_call.1} parent=59 // pred_fallthru
          _
      $region60: #{tpu_custom_call.1} parent=5 // pred_fallthru
        _
    $region6: #{tpu_custom_call.1} parent=1 // loop_footer
      %s20 = sadd.s32 1, %s16
    $region7: #{tpu_custom_call.1} parent=1 // loop_footer_branch
      %15 = sbr.rel target = $region3
    $region8: #{tpu_custom_call.1} parent=1 // loop_exit
      _
    %869 = vsyncpa [#allocation4], 1
    %s870 = scalar_lea.sflag [#allocation4], 1
    %871 = vsyncpa %s870, 1
    %872 = vsyncpa [#allocation7], 1
    %s873 = scalar_lea.sflag [#allocation7], 1
    %874 = vsyncpa %s873, 1
    %875 = vsyncpa [#allocation5], 1
    %s876 = scalar_lea.sflag [#allocation5], 1
    %877 = vsyncpa %s876, 1

</llo_original>
